<compile_context>
chip_gen: v5e
topology: v5e:2x2
jax: 0.10.0
libtpu: 0.0.40
codegen_flags: <defaults>
</compile_context>

<pallas_src>
import math

import jax
import jax.numpy as jnp
from jax.experimental import pallas as pl
from jax.experimental.pallas import tpu as pltpu

LANE = 128


def _round_up(x, m):
    return ((x + m - 1) // m) * m


# ----------------------------------------------------------------------------
# Pallas kernel: Bt batch elements per grid step, fused linear layers.
# ----------------------------------------------------------------------------
def gcn_layer_kernel(adj_ref, ann_ref, wcat_ref, bcat_ref, out_ref):
    bt, n, f = ann_ref.shape
    u2 = wcat_ref.shape[-1]
    up = u2 // 2                      # lane-padded output width (multiple of 128)

    # One big MXU matmul covering BOTH linear layers: (Bt*N, F) @ (F, 2*Up).
    ann2d = ann_ref[...].reshape(bt * n, f)
    hcat = jnp.dot(ann2d, wcat_ref[...], preferred_element_type=jnp.float32)
    hcat = hcat + bcat_ref[...].astype(jnp.float32)
    hcat = hcat.reshape(bt, n, u2)

    h1 = hcat[:, :, :up]              # adj_list(annotations), static 128-aligned split
    h2 = hcat[:, :, up:]              # linear_2(annotations)

    # Batched adjacency contraction; adj stays in its native dtype (no f32 cast).
    adj = adj_ref[...]
    if adj.dtype == jnp.bfloat16:
        h1 = h1.astype(jnp.bfloat16)  # bf16 x bf16 MXU path, f32 accumulation
    h = jnp.einsum("bnm,bmu->bnu", adj, h1, preferred_element_type=jnp.float32)

    # activation = tanh; dropout (eval mode) is identity.
    out_ref[...] = jnp.tanh(h + h2).astype(out_ref.dtype)


def _pick_batch_tile(B, N, F, U2, adj_itemsize, ann_itemsize,
                     bytes_budget=28 * 1024 * 1024):
    """Largest divisor of B whose double-buffered pipeline blocks fit the budget."""
    u_out = U2 // 2
    best = 1
    for bt in range(1, B + 1):
        if B % bt != 0:
            continue
        blk = (bt * N * N * adj_itemsize        # adj block
               + bt * N * F * ann_itemsize      # annotation block
               + bt * N * u_out * ann_itemsize) # output block
        if 2 * blk <= bytes_budget:             # double-buffered
            best = bt
    return best


def gcn_layer_forward(adj, annotations, w_cat, b_cat):
    """adj: (B,N,N), annotations: (B,N,F), w_cat: (F,2*Up), b_cat: (1,2*Up) -> (B,N,Up)."""
    B, N, _ = adj.shape
    F = annotations.shape[-1]
    U2 = w_cat.shape[-1]
    Up = U2 // 2
    assert w_cat.shape[0] == F

    # Pre-cast weights once to the activation dtype (no per-step VPU casts in kernel).
    w_cat = w_cat.astype(annotations.dtype)
    b_cat = b_cat.astype(annotations.dtype)

    bt = _pick_batch_tile(B, N, F, U2,
                          jnp.dtype(adj.dtype).itemsize,
                          jnp.dtype(annotations.dtype).itemsize)

    return pl.pallas_call(
        gcn_layer_kernel,
        out_shape=jax.ShapeDtypeStruct((B, N, Up), annotations.dtype),
        grid_spec=pltpu.PrefetchScalarGridSpec(
            num_scalar_prefetch=0,
            grid=(B // bt,),
            in_specs=[
                pl.BlockSpec((bt, N, N), lambda b: (b, 0, 0)),   # adj
                pl.BlockSpec((bt, N, F), lambda b: (b, 0, 0)),   # annotations
                pl.BlockSpec((F, U2), lambda b: (0, 0)),         # fused [W_adj^T | W2^T]
                pl.BlockSpec((1, U2), lambda b: (0, 0)),         # fused [b_adj | b2]
            ],
            out_specs=pl.BlockSpec((bt, N, Up), lambda b: (b, 0, 0)),
        ),
        compiler_params=pltpu.CompilerParams(
            dimension_semantics=("parallel",),
            vmem_limit_bytes=64 * 1024 * 1024,
        ),
    )(adj, annotations, w_cat, b_cat)


# ----------------------------------------------------------------------------
# PositionalEncoder buffer (host-side constant table, matches the torch loop).
# ----------------------------------------------------------------------------
def make_pe_table(d_model, max_seq_len):
    pe = [[0.0] * d_model for _ in range(max_seq_len)]
    for pos in range(max_seq_len):
        for i in range(0, d_model, 2):
            pe[pos][i] = math.sin(pos / 10000 ** (2 * i / d_model))
            if i + 1 < d_model:
                pe[pos][i + 1] = math.cos(pos / 10000 ** (2 * (i + 1) / d_model))
    return jnp.asarray(pe, dtype=jnp.float32)  # (max_seq_len, d_model)


# ----------------------------------------------------------------------------
# GraphConvolution: stack of GraphConvolutionLayer (tanh activation).
# ----------------------------------------------------------------------------
class GraphConvolutionPallas:
    """Deterministically initialized Pallas port of GraphConvolution."""

    def __init__(self, N, in_features, graph_conv_units, key, dropout_rate=0.0):
        self.N = N
        self.in_features = in_features
        self.units = list(graph_conv_units)
        self.pe = make_pe_table(in_features, N)  # (N, in_features)

        self.w_cats = []       # lane-padded fused weights: (F_in_pad, 2*U_pad)
        self.b_cats = []       # (1, 2*U_pad)
        self._ref_params = []  # unpadded params for the pure-JAX reference

        in_dims = [in_features] + self.units[:-1]
        # Layer 0 sees user annotations (unpadded F); later layers see the lane-padded
        # output of the previous layer, so their weight input dim is padded too.
        in_dims_padded = [in_features] + [_round_up(u, LANE) for u in self.units[:-1]]

        for f_in, f_in_pad, u in zip(in_dims, in_dims_padded, self.units):
            key, k1, k2, k3, k4 = jax.random.split(key, 5)
            bound = 1.0 / math.sqrt(f_in)  # nn.Linear default init range
            w_adj_t = jax.random.uniform(k1, (f_in, u), jnp.float32, -bound, bound)
            b_adj = jax.random.uniform(k2, (1, u), jnp.float32, -bound, bound)
            w2_t = jax.random.uniform(k3, (f_in, u), jnp.float32, -bound, bound)
            b2 = jax.random.uniform(k4, (1, u), jnp.float32, -bound, bound)
            self._ref_params.append((w_adj_t, b_adj, w2_t, b2))

            u_pad = _round_up(u, LANE)
            w_cat = jnp.zeros((f_in_pad, 2 * u_pad), jnp.float32)
            w_cat = w_cat.at[:f_in, :u].set(w_adj_t)
            w_cat = w_cat.at[:f_in, u_pad:u_pad + u].set(w2_t)
            b_cat = jnp.zeros((1, 2 * u_pad), jnp.float32)
            b_cat = b_cat.at[:, :u].set(b_adj)
            b_cat = b_cat.at[:, u_pad:u_pad + u].set(b2)
            self.w_cats.append(w_cat)
            self.b_cats.append(b_cat)

    def __call__(self, adj_tensor, h_tensor=None):
        B, n = adj_tensor.shape[0], adj_tensor.shape[1]
        if h_tensor is not None:
            hidden = h_tensor
        else:
            # PositionalEncoder(zeros): zeros*sqrt(d) + pe[:n]  ==  pe[:n]
            hidden = jnp.broadcast_to(
                self.pe[:n][None, :, :], (B, n, self.in_features)
            ).astype(adj_tensor.dtype)
        # Lane-padded activations are carried between layers (pad columns are exactly 0)
        # and sliced only once at the end.
        for w_cat, b_cat in zip(self.w_cats, self.b_cats):
            hidden = gcn_layer_forward(adj_tensor, hidden, w_cat, b_cat)
        return hidden[:, :, :self.units[-1]]


# ----------------------------------------------------------------------------
# Pure-JAX reference for correctness checking.
# ----------------------------------------------------------------------------
def gcn_reference(adj, annotations, ref_params):
    h = annotations
    for w_adj_t, b_adj, w2_t, b2 in ref_params:
        h1 = jnp.einsum("bij,bjk->bik", adj, h @ w_adj_t + b_adj)
        h2 = h @ w2_t + b2
        h = jnp.tanh(h1 + h2)
    return h


if __name__ == "__main__":
    B, N, F = 2, 8, 32
    units = [64, 32]        # two stacked GraphConvolutionLayers
    key = jax.random.PRNGKey(0)
    k_model, k_adj, k_h = jax.random.split(key, 3)

    model = GraphConvolutionPallas(N=N, in_features=F, graph_conv_units=units, key=k_model)

    adj = jax.random.uniform(k_adj, (B, N, N), jnp.float32)
    h = jax.random.normal(k_h, (B, N, F), jnp.float32)

    # Path 1: explicit h_tensor
    out_h = jax.block_until_ready(model(adj, h))
    # Path 2: h_tensor=None -> positional-encoder annotations
    out_pe = jax.block_until_ready(model(adj, None))

    # Correctness checks against the pure-JAX reference.
    ref_h = gcn_reference(adj, h, model._ref_params)
    ann_pe = jnp.broadcast_to(model.pe[:N][None], (B, N, F)).astype(adj.dtype)
    ref_pe = gcn_reference(adj, ann_pe, model._ref_params)

    assert out_h.shape == (B, N, units[-1])
    assert out_pe.shape == (B, N, units[-1])
    assert jnp.allclose(out_h, ref_h, atol=1e-5, rtol=1e-5)
    assert jnp.allclose(out_pe, ref_pe, atol=1e-5, rtol=1e-5)

    print("KERNEL_OK")
</pallas_src>

<mosaic_0001>
module attributes {stable_mosaic.version = 11 : i64} {
  func.func @gcn_layer_kernel(%arg0: i32, %arg1: memref<2x8x8xf32, #tpu.memory_space<vmem>>, %arg2: memref<2x8x32xf32, #tpu.memory_space<vmem>>, %arg3: memref<32x256xf32, #tpu.memory_space<vmem>>, %arg4: memref<1x256xf32, #tpu.memory_space<vmem>>, %arg5: memref<2x8x128xf32, #tpu.memory_space<vmem>>) attributes {dimension_semantics = [#tpu.dimension_semantics<parallel>], iteration_bounds = array<i64: 1>, scalar_prefetch = 0 : i64, scratch_operands = 0 : i64, tpu.core_type = #tpu.core_type<tc>, window_params = [{transform_indices = @transform_0, window_bounds = array<i64: 2, 8, 8>}, {transform_indices = @transform_1, window_bounds = array<i64: 2, 8, 32>}, {pipeline_mode = #tpu.pipeline_mode<synchronous>, transform_indices = @transform_2, window_bounds = array<i64: 32, 256>}, {pipeline_mode = #tpu.pipeline_mode<synchronous>, transform_indices = @transform_3, window_bounds = array<i64: 1, 256>}, {transform_indices = @transform_4, window_bounds = array<i64: 2, 8, 128>}]} {
    %c0 = arith.constant 0 : index
    %c0_0 = arith.constant 0 : index
    %c0_1 = arith.constant 0 : index
    %0 = vector.load %arg2[%c0, %c0_0, %c0_1] : memref<2x8x32xf32, #tpu.memory_space<vmem>>, vector<2x8x32xf32>
    %1 = vector.shape_cast %0 : vector<2x8x32xf32> to vector<16x32xf32>
    %c0_2 = arith.constant 0 : index
    %c0_3 = arith.constant 0 : index
    %2 = vector.load %arg3[%c0_2, %c0_3] : memref<32x256xf32, #tpu.memory_space<vmem>>, vector<32x256xf32>
    %cst = arith.constant dense<0.000000e+00> : vector<16x256xf32>
    %3 = tpu.matmul %1, %2, %cst {dimension_numbers = #tpu.dot_dimension_numbers<[1], [0], [0], [1], [0, 0, 1, 1], [], []>} : vector<16x32xf32>, vector<32x256xf32>, vector<16x256xf32> -> vector<16x256xf32>
    %c0_4 = arith.constant 0 : index
    %c0_5 = arith.constant 0 : index
    %4 = vector.load %arg4[%c0_4, %c0_5] : memref<1x256xf32, #tpu.memory_space<vmem>>, vector<1x256xf32>
    %5 = vector.broadcast %4 : vector<1x256xf32> to vector<16x256xf32>
    %6 = arith.addf %3, %5 : vector<16x256xf32>
    %7 = vector.shape_cast %6 : vector<16x256xf32> to vector<2x8x256xf32>
    %8 = vector.extract_strided_slice %7 {offsets = [0, 0, 0], sizes = [2, 8, 128], strides = [1, 1, 1]} : vector<2x8x256xf32> to vector<2x8x128xf32>
    %9 = vector.extract_strided_slice %7 {offsets = [0, 0, 128], sizes = [2, 8, 128], strides = [1, 1, 1]} : vector<2x8x256xf32> to vector<2x8x128xf32>
    %c0_6 = arith.constant 0 : index
    %c0_7 = arith.constant 0 : index
    %c0_8 = arith.constant 0 : index
    %10 = vector.load %arg1[%c0_6, %c0_7, %c0_8] : memref<2x8x8xf32, #tpu.memory_space<vmem>>, vector<2x8x8xf32>
    "tpu.trace_start"() <{level = 10 : i32, message = "bnm,bmu->bnu"}> : () -> ()
    %cst_9 = arith.constant dense<0.000000e+00> : vector<2x8x128xf32>
    %11 = tpu.matmul %10, %8, %cst_9 {dimension_numbers = #tpu.dot_dimension_numbers<[2], [1], [1], [2], [0, 0, 0, 1, 1, 2], [0], [0]>} : vector<2x8x8xf32>, vector<2x8x128xf32>, vector<2x8x128xf32> -> vector<2x8x128xf32>
    "tpu.trace_stop"() : () -> ()
    %12 = arith.addf %11, %9 : vector<2x8x128xf32>
    %13 = math.tanh %12 : vector<2x8x128xf32>
    %c0_10 = arith.constant 0 : index
    %c0_11 = arith.constant 0 : index
    %c0_12 = arith.constant 0 : index
    %14 = vector.load %arg5[%c0_10, %c0_11, %c0_12] : memref<2x8x128xf32, #tpu.memory_space<vmem>>, vector<2x8x128xf32>
    tpu.vector_store %arg5[%c0_10, %c0_11, %c0_12], %13 {strides = array<i32>} : memref<2x8x128xf32, #tpu.memory_space<vmem>>, vector<2x8x128xf32>,
    return
  }
  func.func @transform_0(%arg0: i32) -> (i32, i32, i32) {
    %c0_i32 = arith.constant 0 : i32
    %c0_i32_0 = arith.constant 0 : i32
    %c0_i32_1 = arith.constant 0 : i32
    return %arg0, %c0_i32, %c0_i32_0 : i32, i32, i32
  }
  func.func @transform_1(%arg0: i32) -> (i32, i32, i32) {
    %c0_i32 = arith.constant 0 : i32
    %c0_i32_0 = arith.constant 0 : i32
    %c0_i32_1 = arith.constant 0 : i32
    return %arg0, %c0_i32, %c0_i32_0 : i32, i32, i32
  }
  func.func @transform_2(%arg0: i32) -> (i32, i32) {
    %c0_i32 = arith.constant 0 : i32
    %c0_i32_0 = arith.constant 0 : i32
    %c0_i32_1 = arith.constant 0 : i32
    return %c0_i32, %c0_i32_0 : i32, i32
  }
  func.func @transform_3(%arg0: i32) -> (i32, i32) {
    %c0_i32 = arith.constant 0 : i32
    %c0_i32_0 = arith.constant 0 : i32
    %c0_i32_1 = arith.constant 0 : i32
    return %c0_i32, %c0_i32_0 : i32, i32
  }
  func.func @transform_4(%arg0: i32) -> (i32, i32, i32) {
    %c0_i32 = arith.constant 0 : i32
    %c0_i32_0 = arith.constant 0 : i32
    %c0_i32_1 = arith.constant 0 : i32
    return %arg0, %c0_i32, %c0_i32_0 : i32, i32, i32
  }
}

</mosaic_0001>

<llo_original>
// kernel: tpu_custom_call.1
$region0: #{tpu_custom_call.1}
  #allocation0 [shape = 'u32[]', space=smem, size = 0x4, offset = 0x4, fixed_abs, tag = 'smem constant byte address 0x4 - core index']
  #allocation1 [shape = 'u32[72,128]{1,0:T(1,128)}', space=vmem, size = 0x9000, scoped, tag = 'internal scratch']
  %s0 = inlined_call_operand.hbm [shape: f32[2,8,8], index: 0, kind: input, shape index: {}]
  %s1 = inlined_call_operand.hbm [shape: f32[2,8,32], index: 1, kind: input, shape index: {}]
  %s2 = inlined_call_operand.hbm [shape: f32[32,256], index: 2, kind: input, shape index: {}]
  %s3 = inlined_call_operand.vmem [shape: f32[1,256], index: 3, kind: input, shape index: {}]
  %s4 = inlined_call_operand.hbm [shape: f32[2,8,128], index: 4, kind: output, shape index: {}]
  %s5 = sld [smem:[#allocation0]]
  $region38: #{tpu_custom_call.1} parent=0
    _
  %s7 = ssub.s32 1, %s5
  %s8 = scalar_select 0, %s7, %s5
  $region1: #{tpu_custom_call.1} parent=0
    #allocation2 [shape = 'u8[8192]{0}', space=vmem, size = 0x2000, scoped, tag = 'input window, operand 0, single buffered']
    #allocation3 [shape = 's32[1]{0}', space=sflag, size = 0x4, scoped, tag = 'scoped memory for tpu_custom_call.1']
    #allocation4 [shape = 's32[1]{0}', space=sflag, size = 0x4, scoped, tag = 'scoped memory for tpu_custom_call.1']
    #allocation5 [shape = 'u8[8192]{0}', space=vmem, size = 0x2000, scoped, tag = 'input window, operand 1, single buffered']
    #allocation6 [shape = 's32[1]{0}', space=sflag, size = 0x4, scoped, tag = 'scoped memory for tpu_custom_call.1']
    #allocation7 [shape = 'u8[32768]{0}', space=vmem, size = 0x8000, scoped, tag = 'input window, operand 2, single buffered']
    #allocation8 [shape = 'u8[8192]{0}', space=vmem, size = 0x2000, scoped, tag = 'output window, operand 0, single buffered']
    %9 = vsyncpa [#allocation3], 0
    %10 = vsyncpa [#allocation6], 0
    %11 = vsyncpa [#allocation4], 0
    // Predicated region
    $region2: #{tpu_custom_call.1} parent=1 // pred_check
      _
    $region3: #{tpu_custom_call.1} parent=1 // pred_check_branch
      %13 = sbr.rel (0) target = $region5
    $region4: #{tpu_custom_call.1} parent=1 // pred_region
      %15 = vsyncadd [#allocation3], 0
      %s16 = sshll.u32 %s0, 4
      %s17 = int_to_ptr.hbm [resolvable:$true] %s16
      %s18 = sshll.u32 [#allocation2], 4
      %s19 = int_to_ptr.vmem [resolvable:$true] %s18
      %24 = dma.hbm_to_vmem [thread:$0]  %s17, 256, %s19, [#allocation3], 128, 128, 8
    $region5: #{tpu_custom_call.1} parent=1 // pred_fallthru
      _
    // Predicated region
    $region6: #{tpu_custom_call.1} parent=1 // pred_check
      _
    $region7: #{tpu_custom_call.1} parent=1 // pred_check_branch
      %26 = sbr.rel (0) target = $region9
    $region8: #{tpu_custom_call.1} parent=1 // pred_region
      %28 = vsyncadd [#allocation6], 0
      %s29 = sshll.u32 %s1, 4
      %s30 = int_to_ptr.hbm [resolvable:$true] %s29
      %s31 = sshll.u32 [#allocation5], 4
      %s32 = int_to_ptr.vmem [resolvable:$true] %s31
      %37 = dma.hbm_to_vmem [thread:$0]  %s30, 256, %s32, [#allocation6], 128, 128, 8
    $region9: #{tpu_custom_call.1} parent=1 // pred_fallthru
      _
    // Predicated region
    $region10: #{tpu_custom_call.1} parent=1 // pred_check
      _
    $region11: #{tpu_custom_call.1} parent=1 // pred_check_branch
      %39 = sbr.rel (0) target = $region13
    $region12: #{tpu_custom_call.1} parent=1 // pred_region
      %41 = vsyncadd [#allocation6], 0
      %s42 = sshll.u32 %s2, 4
      %s43 = int_to_ptr.hbm [resolvable:$true] %s42
      %s44 = sshll.u32 [#allocation7], 4
      %s45 = int_to_ptr.vmem [resolvable:$true] %s44
      %50 = dma.hbm_to_vmem [thread:$0]  %s43, 1024, %s45, [#allocation6], 256, 256, 16
    $region13: #{tpu_custom_call.1} parent=1 // pred_fallthru
      _
    // Predicated region
    $region14: #{tpu_custom_call.1} parent=1 // pred_check
      _
    $region15: #{tpu_custom_call.1} parent=1 // pred_check_branch
      %52 = sbr.rel (0) target = $region17
    $region16: #{tpu_custom_call.1} parent=1 // pred_region
      _
    $region17: #{tpu_custom_call.1} parent=1 // pred_fallthru
      _
    // Predicated region
    $region18: #{tpu_custom_call.1} parent=1 // pred_check
      _
    $region19: #{tpu_custom_call.1} parent=1 // pred_check_branch
      %54 = sbr.rel (0) target = $region21
    $region20: #{tpu_custom_call.1} parent=1 // pred_region
      %56 = dma.done [#allocation3], 256
    $region21: #{tpu_custom_call.1} parent=1 // pred_fallthru
      _
    // Predicated region
    $region22: #{tpu_custom_call.1} parent=1 // pred_check
      _
    $region23: #{tpu_custom_call.1} parent=1 // pred_check_branch
      %58 = sbr.rel (0) target = $region25
    $region24: #{tpu_custom_call.1} parent=1 // pred_region
      %60 = dma.done [#allocation6], 256
    $region25: #{tpu_custom_call.1} parent=1 // pred_fallthru
      _
    // Predicated region
    $region26: #{tpu_custom_call.1} parent=1 // pred_check
      _
    $region27: #{tpu_custom_call.1} parent=1 // pred_check_branch
      %62 = sbr.rel (0) target = $region29
    $region28: #{tpu_custom_call.1} parent=1 // pred_region
      %64 = dma.done [#allocation6], 1024
    $region29: #{tpu_custom_call.1} parent=1 // pred_fallthru
      _
    %v65 = vld [vmem:[#allocation5] sm:$0xff]
    %v66 = vld [vmem:[#allocation5 + $0x8] sm:$0xff]
    %v67 = vld [vmem:[#allocation7] sm:$0xff]
    %v68 = vld [vmem:[#allocation7 + $0x8] sm:$0xff]
    %v69 = vld [vmem:[#allocation7 + $0x10] sm:$0xff]
    %v70 = vld [vmem:[#allocation7 + $0x18] sm:$0xff]
    %v71 = vld [vmem:[#allocation7 + $0x20] sm:$0xff]
    %v72 = vld [vmem:[#allocation7 + $0x28] sm:$0xff]
    %v73 = vld [vmem:[#allocation7 + $0x30] sm:$0xff]
    %v74 = vld [vmem:[#allocation7 + $0x38] sm:$0xff]
    %v75 = vld [vmem:[%s3] sm:$0x3]
    %v77 = vperm.slane %v75, 0
    %v78 = vperm.slane %v75, 1
    %vm81 = vcmask 261120
    %v83 = vsel %vm81, %v65, 0
    %v86 = vsel %vm81, %v66, 0
    %88 = vmatpush.msra.mxu0 0.0
    %89 = vmatpush.msra.mxu0 0.0
    %90 = vmatpush.msra.mxu0 0.0
    %91 = vmatpush.msra.mxu0 0.0
    %92 = vmatpush.msra.mxu0 0.0
    %93 = vmatpush.msra.mxu0 0.0
    %94 = vmatpush.msra.mxu0 0.0
    %95 = vmatpush.msra.mxu0 0.0
    %96 = vmatpush.msra.mxu0 0.0
    %97 = vmatpush.msra.mxu0 0.0
    %98 = vmatpush.msra.mxu0 0.0
    %99 = vmatpush.msra.mxu0 0.0
    %100 = vmatpush.msra.mxu0 %v73
    %101 = vmatpush.msra.mxu0 %v71
    %102 = vmatpush.msra.mxu0 %v69
    %103 = vmatpush.msra.mxu0 %v67
    %104 = vmatmul.f32.gmra.mxu0 %v83
    %v105 = vpop.f32.mrf.mxu0
    %v106 = vadd.f32 %v77, %v105
    %107 = vmatmul.f32.gmra.mxu0 %v86
    %v108 = vpop.f32.mrf.mxu0
    %v109 = vadd.f32 %v77, %v108
    %110 = vdwg.mxu0
    %111 = vmatpush.msra.mxu0 0.0
    %112 = vmatpush.msra.mxu0 0.0
    %113 = vmatpush.msra.mxu0 0.0
    %114 = vmatpush.msra.mxu0 0.0
    %115 = vmatpush.msra.mxu0 0.0
    %116 = vmatpush.msra.mxu0 0.0
    %117 = vmatpush.msra.mxu0 0.0
    %118 = vmatpush.msra.mxu0 0.0
    %119 = vmatpush.msra.mxu0 0.0
    %120 = vmatpush.msra.mxu0 0.0
    %121 = vmatpush.msra.mxu0 0.0
    %122 = vmatpush.msra.mxu0 0.0
    %123 = vmatpush.msra.mxu0 %v74
    %124 = vmatpush.msra.mxu0 %v72
    %125 = vmatpush.msra.mxu0 %v70
    %126 = vmatpush.msra.mxu0 %v68
    %127 = vmatmul.f32.gmra.mxu0 %v83
    %v128 = vpop.f32.mrf.mxu0
    %v129 = vadd.f32 %v78, %v128
    %130 = vmatmul.f32.gmra.mxu0 %v86
    %v131 = vpop.f32.mrf.mxu0
    %v132 = vadd.f32 %v78, %v131
    %133 = vdwg.mxu0
    %v134 = vld [vmem:[#allocation2] sm:$0xff]
    %v135 = vld [vmem:[#allocation2 + $0x8] sm:$0xff]
    %vm136 = vcmask 64512
    %v138 = vsel %vm136, %v134, 0
    %140 = vmatpush.msra.mxu0 0.0
    %141 = vmatpush.msra.mxu0 0.0
    %142 = vmatpush.msra.mxu0 0.0
    %143 = vmatpush.msra.mxu0 0.0
    %144 = vmatpush.msra.mxu0 0.0
    %145 = vmatpush.msra.mxu0 0.0
    %146 = vmatpush.msra.mxu0 0.0
    %147 = vmatpush.msra.mxu0 0.0
    %148 = vmatpush.msra.mxu0 0.0
    %149 = vmatpush.msra.mxu0 0.0
    %150 = vmatpush.msra.mxu0 0.0
    %151 = vmatpush.msra.mxu0 0.0
    %152 = vmatpush.msra.mxu0 0.0
    %153 = vmatpush.msra.mxu0 0.0
    %154 = vmatpush.msra.mxu0 0.0
    %155 = vmatpush.msra.mxu0 %v106
    %156 = vmatmul.f32.gmra.mxu0 %v138
    %v157 = vpop.f32.mrf.mxu0
    %v158 = vadd.f32 %v129, %v157
    %159 = vdwg.mxu0
    %v161 = vsel %vm136, %v135, 0
    %163 = vmatpush.msra.mxu0 0.0
    %164 = vmatpush.msra.mxu0 0.0
    %165 = vmatpush.msra.mxu0 0.0
    %166 = vmatpush.msra.mxu0 0.0
    %167 = vmatpush.msra.mxu0 0.0
    %168 = vmatpush.msra.mxu0 0.0
    %169 = vmatpush.msra.mxu0 0.0
    %170 = vmatpush.msra.mxu0 0.0
    %171 = vmatpush.msra.mxu0 0.0
    %172 = vmatpush.msra.mxu0 0.0
    %173 = vmatpush.msra.mxu0 0.0
    %174 = vmatpush.msra.mxu0 0.0
    %175 = vmatpush.msra.mxu0 0.0
    %176 = vmatpush.msra.mxu0 0.0
    %177 = vmatpush.msra.mxu0 0.0
    %178 = vmatpush.msra.mxu0 %v109
    %179 = vmatmul.f32.gmra.mxu0 %v161
    %v180 = vpop.f32.mrf.mxu0
    %v181 = vadd.f32 %v132, %v180
    %182 = vdwg.mxu0
    %v183 = vtanh.pop %v158
    %v184 = vtanh.pop %v181
    %185 = vst [vmem:[#allocation8] sm:$0xff] %v183
    %186 = vst [vmem:[#allocation8 + $0x8] sm:$0xff] %v184
    // Predicated region
    $region30: #{tpu_custom_call.1} parent=1 // pred_check
      _
    $region31: #{tpu_custom_call.1} parent=1 // pred_check_branch
      %188 = sbr.rel (0) target = $region33
    $region32: #{tpu_custom_call.1} parent=1 // pred_region
      %190 = vsyncadd [#allocation4], 0
      %s191 = sshll.u32 [#allocation8], 4
      %s192 = int_to_ptr.vmem [resolvable:$true] %s191
      %s193 = sshll.u32 %s4, 4
      %s194 = int_to_ptr.hbm [resolvable:$true] %s193
      %199 = dma.vmem_to_hbm [thread:$0]  %s192, 256, %s194, [#allocation4], 128, 128, 8
    $region33: #{tpu_custom_call.1} parent=1 // pred_fallthru
      _
    // Predicated region
    $region34: #{tpu_custom_call.1} parent=1 // pred_check
      _
    $region35: #{tpu_custom_call.1} parent=1 // pred_check_branch
      %201 = sbr.rel (0) target = $region37
    $region36: #{tpu_custom_call.1} parent=1 // pred_region
      %203 = dma.done [#allocation4], 256
    $region37: #{tpu_custom_call.1} parent=1 // pred_fallthru
      _
    %204 = vsyncpa [#allocation3], 1
    %205 = vsyncpa [#allocation6], 1
    %206 = vsyncpa [#allocation4], 1

</llo_original>
